<compile_context>
chip_gen: v5e
topology: v5e:2x2
jax: 0.10.0
libtpu: 0.0.40
codegen_flags: <defaults>
</compile_context>

<pallas_src>
import functools

import jax
import jax.numpy as jnp
from jax import lax
from jax.experimental import pallas as pl
from jax.experimental.pallas import tpu as pltpu

_SUB = 8                 # f32 sublanes per vreg
_LANE = 128              # lanes per vreg
_MAX_BLOCK_ROWS = 2048   # 2048 x 128 x 4B = 1 MiB per input per buffer
_NUM_CORES = 2           # leading "parallel" grid axis (sharded on v7x)


def _loss_kernel(inp_ref, tgt_ref, logv_ref, out_ref, *,
                 c_scale, block_rows, inner_tiles, rows_total, needs_mask):
    c = pl.program_id(0)   # core / parallel axis
    i = pl.program_id(1)   # sequential streaming (accumulation) axis

    @pl.when(i == 0)
    def _():
        out_ref[...] = jnp.zeros_like(out_ref)

    x = inp_ref[...].astype(jnp.float32)
    t = tgt_ref[...].astype(jnp.float32)
    lv = logv_ref[...].astype(jnp.float32)

    # c_scale == 1.4142 * depth_focus (folded at trace time).
    loss = c_scale * jnp.exp(-lv) * jnp.abs(x - t) + lv

    if needs_mask:
        # Zero the full loss term for rows past the real data (partial
        # boundary blocks and clamped duplicate blocks of the core split).
        row_local = lax.broadcasted_iota(jnp.int32, loss.shape, 0)
        global_row = (c * inner_tiles + i) * block_rows + row_local
        loss = jnp.where(global_row < rows_total, loss, 0.0)

    # (block_rows,128) -> (block_rows//8, 8, 128) groups whole vregs, so the
    # axis-0 reduction is pure elementwise VALU adds; no cross-lane traffic
    # in the hot loop.
    partial = loss.reshape(-1, _SUB, _LANE).sum(axis=0)
    out_ref[...] += partial.reshape(out_ref.shape)


def laplacian_aleatoric_uncertainty_loss(inp, target, log_variance,
                                         loss_weight=1.0,
                                         depth_focus=1.0,
                                         variance_focus=0.1):
    # variance_focus is stored by the PyTorch module but unused in forward().
    del variance_focus

    x = jnp.ravel(inp)
    t = jnp.ravel(target)
    lv = jnp.ravel(log_variance)

    n = x.shape[0]
    if n == 0:
        # torch.mean of an empty tensor is NaN; abs(NaN * w) is NaN.
        return jnp.abs(jnp.float32(float("nan")) * jnp.float32(loss_weight))

    # Tail-pad (only when needed) so the flat length is a multiple of 8*128.
    # Padded zeros contribute exactly 0: 1.4142*exp(0)*|0-0| + 0 == 0, and the
    # mean below divides by the true n.
    tile_elems = _SUB * _LANE
    n_pad = pl.cdiv(n, tile_elems) * tile_elems
    if n_pad != n:
        pad = (0, n_pad - n)
        x, t, lv = jnp.pad(x, pad), jnp.pad(t, pad), jnp.pad(lv, pad)

    rows_total = n_pad // _LANE                      # multiple of 8
    block_rows = min(_MAX_BLOCK_ROWS, rows_total)    # multiple of 8
    total_blocks = pl.cdiv(rows_total, block_rows)
    inner_tiles = pl.cdiv(total_blocks, _NUM_CORES)
    needs_mask = (_NUM_CORES * inner_tiles * block_rows) != rows_total

    x2 = x.reshape(rows_total, _LANE)
    t2 = t.reshape(rows_total, _LANE)
    lv2 = lv.reshape(rows_total, _LANE)

    def in_map(c, i):
        # Clamp so duplicate blocks handed to the second half of the grid
        # (odd / tiny block counts) stay in bounds; they are fully masked
        # inside the kernel, so they contribute 0.
        return (jnp.minimum(c * inner_tiles + i, total_blocks - 1), 0)

    in_spec = pl.BlockSpec((block_rows, _LANE), in_map)
    out_spec = pl.BlockSpec((1, _SUB, _LANE), lambda c, i: (c, 0, 0))

    kernel = functools.partial(
        _loss_kernel,
        c_scale=1.4142 * float(depth_focus),
        block_rows=block_rows,
        inner_tiles=inner_tiles,
        rows_total=rows_total,
        needs_mask=needs_mask,
    )

    partials = pl.pallas_call(
        kernel,
        out_shape=jax.ShapeDtypeStruct((_NUM_CORES, _SUB, _LANE), jnp.float32),
        grid_spec=pltpu.PrefetchScalarGridSpec(
            num_scalar_prefetch=0,
            grid=(_NUM_CORES, inner_tiles),
            in_specs=[in_spec, in_spec, in_spec],
            out_specs=out_spec,
        ),
        compiler_params=pltpu.CompilerParams(
            dimension_semantics=("parallel", "arbitrary"),
        ),
    )(x2, t2, lv2)

    mean_loss = jnp.sum(partials) / jnp.float32(n)
    return jnp.abs(mean_loss * jnp.float32(loss_weight))


def _reference(inp, target, log_variance, loss_weight=1.0, depth_focus=1.0):
    x = jnp.ravel(inp).astype(jnp.float32)
    t = jnp.ravel(target).astype(jnp.float32)
    lv = jnp.ravel(log_variance).astype(jnp.float32)
    loss = 1.4142 * jnp.exp(-lv) * (depth_focus * jnp.abs(x - t)) + lv
    return jnp.abs(jnp.mean(loss) * loss_weight)


if __name__ == "__main__":
    key = jax.random.PRNGKey(0)
    k1, k2, k3 = jax.random.split(key, 3)

    # NCHW-style prediction maps (layout is irrelevant post-flatten).
    shape = (2, 4, 16, 16)
    inp = jax.random.normal(k1, shape, dtype=jnp.float32)
    target = jax.random.normal(k2, shape, dtype=jnp.float32)
    log_variance = 0.5 * jax.random.normal(k3, shape, dtype=jnp.float32)

    out = laplacian_aleatoric_uncertainty_loss(
        inp, target, log_variance,
        loss_weight=1.0, depth_focus=1.0, variance_focus=0.1)
    out = jax.block_until_ready(out)

    ref = _reference(inp, target, log_variance, 1.0, 1.0)
    assert jnp.allclose(out, ref, rtol=1e-5, atol=1e-5), (out, ref)

    print("KERNEL_OK")
</pallas_src>

<mosaic_0001>
module attributes {stable_mosaic.version = 11 : i64} {
  func.func @_loss_kernel(%arg0: i32, %arg1: i32, %arg2: memref<16x128xf32, #tpu.memory_space<vmem>>, %arg3: memref<16x128xf32, #tpu.memory_space<vmem>>, %arg4: memref<16x128xf32, #tpu.memory_space<vmem>>, %arg5: memref<1x8x128xf32, #tpu.memory_space<vmem>>) attributes {dimension_semantics = [#tpu.dimension_semantics<parallel>, #tpu.dimension_semantics<arbitrary>], iteration_bounds = array<i64: 2, 1>, scalar_prefetch = 0 : i64, scratch_operands = 0 : i64, tpu.core_type = #tpu.core_type<tc>, window_params = [{transform_indices = @transform_0, window_bounds = array<i64: 16, 128>}, {transform_indices = @transform_1, window_bounds = array<i64: 16, 128>}, {transform_indices = @transform_2, window_bounds = array<i64: 16, 128>}, {transform_indices = @transform_3, window_bounds = array<i64: 1, 8, 128>}]} {
    %c0_i32 = arith.constant 0 : i32
    %0 = arith.cmpi eq, %arg1, %c0_i32 : i32
    %1 = arith.extui %0 : i1 to i32
    %c0_i32_0 = arith.constant 0 : i32
    %2 = arith.cmpi ne, %1, %c0_i32_0 : i32
    scf.if %2 {
      %cst_16 = arith.constant 0.000000e+00 : f32
      %31 = vector.broadcast %cst_16 : f32 to vector<1x8x128xf32>
      %c0_17 = arith.constant 0 : index
      %c0_18 = arith.constant 0 : index
      %c0_19 = arith.constant 0 : index
      %32 = vector.load %arg5[%c0_17, %c0_18, %c0_19] : memref<1x8x128xf32, #tpu.memory_space<vmem>>, vector<1x8x128xf32>
      tpu.vector_store %arg5[%c0_17, %c0_18, %c0_19], %31 {strides = array<i32>} : memref<1x8x128xf32, #tpu.memory_space<vmem>>, vector<1x8x128xf32>,
    } else {
    }
    %c0 = arith.constant 0 : index
    %c0_1 = arith.constant 0 : index
    %3 = vector.load %arg2[%c0, %c0_1] : memref<16x128xf32, #tpu.memory_space<vmem>>, vector<16x128xf32>
    %c0_2 = arith.constant 0 : index
    %c0_3 = arith.constant 0 : index
    %4 = vector.load %arg3[%c0_2, %c0_3] : memref<16x128xf32, #tpu.memory_space<vmem>>, vector<16x128xf32>
    %c0_4 = arith.constant 0 : index
    %c0_5 = arith.constant 0 : index
    %5 = vector.load %arg4[%c0_4, %c0_5] : memref<16x128xf32, #tpu.memory_space<vmem>>, vector<16x128xf32>
    %cst = arith.constant 0.000000e+00 : f32
    %6 = vector.broadcast %cst : f32 to vector<16x128xf32>
    %7 = arith.subf %6, %5 : vector<16x128xf32>
    %8 = math.exp %7 : vector<16x128xf32>
    %cst_6 = arith.constant 1.414200e+00 : f32
    %9 = vector.broadcast %cst_6 : f32 to vector<16x128xf32>
    %10 = arith.mulf %9, %8 : vector<16x128xf32>
    %11 = arith.subf %3, %4 : vector<16x128xf32>
    %12 = math.absf %11 : vector<16x128xf32>
    %13 = arith.mulf %10, %12 : vector<16x128xf32>
    %14 = arith.addf %13, %5 : vector<16x128xf32>
    %15 = tpu.iota {dimensions = array<i32: 0>} : vector<16x128xi32>
    %c1_i32 = arith.constant 1 : i32
    %16 = arith.muli %arg0, %c1_i32 : i32
    %17 = arith.addi %16, %arg1 : i32
    %c16_i32 = arith.constant 16 : i32
    %18 = arith.muli %17, %c16_i32 : i32
    %19 = vector.broadcast %18 : i32 to vector<16x128xi32>
    %20 = arith.addi %19, %15 : vector<16x128xi32>
    %c16_i32_7 = arith.constant 16 : i32
    %21 = vector.broadcast %c16_i32_7 : i32 to vector<16x128xi32>
    %22 = arith.cmpi slt, %20, %21 : vector<16x128xi32>
    %cst_8 = arith.constant 0.000000e+00 : f32
    %23 = vector.broadcast %cst_8 : f32 to vector<16x128xf32>
    %24 = arith.select %22, %14, %23 : vector<16x128xi1>, vector<16x128xf32>
    %25 = vector.shape_cast %24 : vector<16x128xf32> to vector<2x8x128xf32>
    %cst_9 = arith.constant dense<0.000000e+00> : vector<8x128xf32>
    %26 = vector.multi_reduction <add>, %25, %cst_9 [0] : vector<2x8x128xf32> to vector<8x128xf32>
    %c0_10 = arith.constant 0 : index
    %c0_11 = arith.constant 0 : index
    %c0_12 = arith.constant 0 : index
    %27 = vector.load %arg5[%c0_10, %c0_11, %c0_12] : memref<1x8x128xf32, #tpu.memory_space<vmem>>, vector<1x8x128xf32>
    %28 = vector.shape_cast %26 : vector<8x128xf32> to vector<1x8x128xf32>
    %29 = arith.addf %27, %28 : vector<1x8x128xf32>
    %c0_13 = arith.constant 0 : index
    %c0_14 = arith.constant 0 : index
    %c0_15 = arith.constant 0 : index
    %30 = vector.load %arg5[%c0_13, %c0_14, %c0_15] : memref<1x8x128xf32, #tpu.memory_space<vmem>>, vector<1x8x128xf32>
    tpu.vector_store %arg5[%c0_13, %c0_14, %c0_15], %29 {strides = array<i32>} : memref<1x8x128xf32, #tpu.memory_space<vmem>>, vector<1x8x128xf32>,
    return
  }
  func.func @transform_0(%arg0: i32, %arg1: i32) -> (i32, i32) {
    %c1_i32 = arith.constant 1 : i32
    %0 = arith.muli %arg0, %c1_i32 : i32
    %1 = arith.addi %0, %arg1 : i32
    %c0_i32 = arith.constant 0 : i32
    %2 = arith.minsi %1, %c0_i32 : i32
    %c0_i32_0 = arith.constant 0 : i32
    %c0_i32_1 = arith.constant 0 : i32
    return %2, %c0_i32_0 : i32, i32
  }
  func.func @transform_1(%arg0: i32, %arg1: i32) -> (i32, i32) {
    %c1_i32 = arith.constant 1 : i32
    %0 = arith.muli %arg0, %c1_i32 : i32
    %1 = arith.addi %0, %arg1 : i32
    %c0_i32 = arith.constant 0 : i32
    %2 = arith.minsi %1, %c0_i32 : i32
    %c0_i32_0 = arith.constant 0 : i32
    %c0_i32_1 = arith.constant 0 : i32
    return %2, %c0_i32_0 : i32, i32
  }
  func.func @transform_2(%arg0: i32, %arg1: i32) -> (i32, i32) {
    %c1_i32 = arith.constant 1 : i32
    %0 = arith.muli %arg0, %c1_i32 : i32
    %1 = arith.addi %0, %arg1 : i32
    %c0_i32 = arith.constant 0 : i32
    %2 = arith.minsi %1, %c0_i32 : i32
    %c0_i32_0 = arith.constant 0 : i32
    %c0_i32_1 = arith.constant 0 : i32
    return %2, %c0_i32_0 : i32, i32
  }
  func.func @transform_3(%arg0: i32, %arg1: i32) -> (i32, i32, i32) {
    %c0_i32 = arith.constant 0 : i32
    %c0_i32_0 = arith.constant 0 : i32
    %c0_i32_1 = arith.constant 0 : i32
    return %arg0, %c0_i32, %c0_i32_0 : i32, i32, i32
  }
}

</mosaic_0001>

<llo_original>
// kernel: tpu_custom_call.1
$region0: #{tpu_custom_call.1}
  #allocation0 [shape = 'u32[]', space=smem, size = 0x4, offset = 0x4, fixed_abs, tag = 'smem constant byte address 0x4 - core index']
  #allocation1 [shape = 'u32[72,128]{1,0:T(1,128)}', space=vmem, size = 0x9000, scoped, tag = 'internal scratch']
  %s0 = inlined_call_operand.hbm [shape: f32[16,128], index: 0, kind: input, shape index: {}]
  %s1 = inlined_call_operand.hbm [shape: f32[16,128], index: 1, kind: input, shape index: {}]
  %s2 = inlined_call_operand.hbm [shape: f32[16,128], index: 2, kind: input, shape index: {}]
  %s3 = inlined_call_operand.hbm [shape: f32[2,8,128], index: 3, kind: output, shape index: {}]
  %s4 = sld [smem:[#allocation0]]
  $region61: #{tpu_custom_call.1} parent=0
    _
  %s6 = ssub.s32 1, %s4
  %s7 = scalar_select 0, %s6, %s4
  $region1: #{tpu_custom_call.1} parent=0
    #allocation2 [shape = 'u8[16384]{0}', space=vmem, size = 0x4000, scoped, tag = 'input window, operand 0']
    #allocation3 [shape = 's32[2]{0}', space=sflag, size = 0x8, scoped, tag = 'scoped memory for tpu_custom_call.1']
    #allocation4 [shape = 's32[2]{0}', space=sflag, size = 0x8, scoped, tag = 'scoped memory for tpu_custom_call.1']
    #allocation5 [shape = 'u8[16384]{0}', space=vmem, size = 0x4000, scoped, tag = 'input window, operand 1']
    #allocation6 [shape = 's32[2]{0}', space=sflag, size = 0x8, scoped, tag = 'scoped memory for tpu_custom_call.1']
    #allocation7 [shape = 'u8[16384]{0}', space=vmem, size = 0x4000, scoped, tag = 'input window, operand 2']
    #allocation8 [shape = 'u8[8192]{0}', space=vmem, size = 0x2000, scoped, tag = 'output window, operand 0']
    %8 = vsyncpa [#allocation3], 0
    %s9 = scalar_lea.sflag [#allocation3], 1
    %10 = vsyncpa %s9, 0
    %11 = vsyncpa [#allocation6], 0
    %s12 = scalar_lea.sflag [#allocation6], 1
    %13 = vsyncpa %s12, 0
    %14 = vsyncpa [#allocation4], 0
    %s15 = scalar_lea.sflag [#allocation4], 1
    %16 = vsyncpa %s15, 0
    loop: start=0, step=1, limit=4
    $region2: #{tpu_custom_call.1} parent=1 // loop_pre_header
      _
    $region3: #{tpu_custom_call.1} parent=1 // loop_header
      %s18 = sphi 0, %s22
      %p19 = scmp.ge.s32.totalorder %s18, 4
      %s25 = sphi 0, %s37
      %s26 = sphi 0, %s33
      %s27 = sphi 0, %s25
      %s28 = sphi 0, %s26
      %s29 = sphi 0, %s27
      %s30 = sphi 0, %s28
      %s46 = sphi 0, %s48
      %s49 = sphi 0, %s46
      %s50 = sphi 0, %s49
      %s66 = sphi 0, %s50
      %s78 = sphi 0, %s80
      %s81 = sphi 0, %s78
      %s82 = sphi 0, %s81
      %s98 = sphi 0, %s82
      %s110 = sphi 0, %s112
      %s113 = sphi 0, %s110
      %s114 = sphi 0, %s113
      %s130 = sphi 0, %s114
      %s136 = sphi 0, %s138
      %s139 = sphi 0, %s136
      %s140 = sphi 0, %s139
      %s156 = sphi 0, %s140
    $region4: #{tpu_custom_call.1} parent=1 // loop_header_branch
      %21 = sbr.rel (%p19) target = $region8
    $region5: #{tpu_custom_call.1} parent=1 // loop_body
      %s23 = ssub.s32 %s18, 1
      %s24 = ssub.s32 %s18, 2
      %s31 = sadd.s32 1, %s26
      %p32 = scmp.ge.s32.totalorder %s31, 1
      %s33 = scalar_select %p32, 0, %s31
      %s34 = sadd.s32 1, %s25
      %s35 = scalar_select %p32, %s34, %s25
      %p36 = scmp.ge.s32.totalorder %s35, 2
      %s37 = scalar_select %p36, 0, %s35
      %s38 = sadd.s32 %s25, %s26
      %p39 = scmp.lt.s32.totalorder %s38, 0
      %s40 = scalar_select %p39, %s38, 0
      %s41 = sadd.s32 %s37, %s33
      %p42 = scmp.lt.s32.totalorder %s41, 0
      %s43 = scalar_select %p42, %s41, 0
      %s44 = ssub.s32 %s40, %s43
      %p45 = scmp.eq.s32.totalorder %s44, 0
      %s47 = sadd.s32 %s46, 1
      %s48 = scalar_select %p45, %s46, %s47
      %p51 = pneg %p45
      %p52 = scmp.eq.s32.totalorder %s18, 1
      %p53 = por %p51, %p52
      %p54 = scmp.ne.s32.totalorder %s46, %s49
      %p55 = scmp.eq.s32.totalorder %s18, 0
      %p56 = por %p54, %p55
      %p57 = scmp.ne.s32.totalorder %s46, %s49
      %p58 = scmp.eq.s32.totalorder %s23, 1
      %p59 = por %p57, %p58
      %p60 = scmp.ne.s32.totalorder %s49, %s50
      %p61 = scmp.eq.s32.totalorder %s23, 0
      %p62 = por %p60, %p61
      %p63 = scmp.ne.s32.totalorder %s49, %s50
      %p64 = scmp.eq.s32.totalorder %s24, 1
      %p65 = por %p63, %p64
      %p67 = scmp.ne.s32.totalorder %s50, %s66
      %p68 = scmp.eq.s32.totalorder %s24, 0
      %p69 = por %p67, %p68
      %s70 = sadd.s32 %s25, %s26
      %p71 = scmp.lt.s32.totalorder %s70, 0
      %s72 = scalar_select %p71, %s70, 0
      %s73 = sadd.s32 %s37, %s33
      %p74 = scmp.lt.s32.totalorder %s73, 0
      %s75 = scalar_select %p74, %s73, 0
      %s76 = ssub.s32 %s72, %s75
      %p77 = scmp.eq.s32.totalorder %s76, 0
      %s79 = sadd.s32 %s78, 1
      %s80 = scalar_select %p77, %s78, %s79
      %p83 = pneg %p77
      %p84 = scmp.eq.s32.totalorder %s18, 1
      %p85 = por %p83, %p84
      %p86 = scmp.ne.s32.totalorder %s78, %s81
      %p87 = scmp.eq.s32.totalorder %s18, 0
      %p88 = por %p86, %p87
      %p89 = scmp.ne.s32.totalorder %s78, %s81
      %p90 = scmp.eq.s32.totalorder %s23, 1
      %p91 = por %p89, %p90
      %p92 = scmp.ne.s32.totalorder %s81, %s82
      %p93 = scmp.eq.s32.totalorder %s23, 0
      %p94 = por %p92, %p93
      %p95 = scmp.ne.s32.totalorder %s81, %s82
      %p96 = scmp.eq.s32.totalorder %s24, 1
      %p97 = por %p95, %p96
      %p99 = scmp.ne.s32.totalorder %s82, %s98
      %p100 = scmp.eq.s32.totalorder %s24, 0
      %p101 = por %p99, %p100
      %s102 = sadd.s32 %s25, %s26
      %p103 = scmp.lt.s32.totalorder %s102, 0
      %s104 = scalar_select %p103, %s102, 0
      %s105 = sadd.s32 %s37, %s33
      %p106 = scmp.lt.s32.totalorder %s105, 0
      %s107 = scalar_select %p106, %s105, 0
      %s108 = ssub.s32 %s104, %s107
      %p109 = scmp.eq.s32.totalorder %s108, 0
      %s111 = sadd.s32 %s110, 1
      %s112 = scalar_select %p109, %s110, %s111
      %p115 = pneg %p109
      %p116 = scmp.eq.s32.totalorder %s18, 1
      %p117 = por %p115, %p116
      %p118 = scmp.ne.s32.totalorder %s110, %s113
      %p119 = scmp.eq.s32.totalorder %s18, 0
      %p120 = por %p118, %p119
      %p121 = scmp.ne.s32.totalorder %s110, %s113
      %p122 = scmp.eq.s32.totalorder %s23, 1
      %p123 = por %p121, %p122
      %p124 = scmp.ne.s32.totalorder %s113, %s114
      %p125 = scmp.eq.s32.totalorder %s23, 0
      %p126 = por %p124, %p125
      %p127 = scmp.ne.s32.totalorder %s113, %s114
      %p128 = scmp.eq.s32.totalorder %s24, 1
      %p129 = por %p127, %p128
      %p131 = scmp.ne.s32.totalorder %s114, %s130
      %p132 = scmp.eq.s32.totalorder %s24, 0
      %p133 = por %p131, %p132
      %s134 = ssub.s32 %s25, %s37
      %p135 = scmp.eq.s32.totalorder %s134, 0
      %s137 = sadd.s32 %s136, 1
      %s138 = scalar_select %p135, %s136, %s137
      %p141 = pneg %p135
      %p142 = scmp.eq.s32.totalorder %s18, 1
      %p143 = por %p141, %p142
      %p144 = scmp.ne.s32.totalorder %s136, %s139
      %p145 = scmp.eq.s32.totalorder %s18, 0
      %p146 = por %p144, %p145
      %p147 = scmp.ne.s32.totalorder %s136, %s139
      %p148 = scmp.eq.s32.totalorder %s23, 1
      %p149 = por %p147, %p148
      %p150 = scmp.ne.s32.totalorder %s139, %s140
      %p151 = scmp.eq.s32.totalorder %s23, 0
      %p152 = por %p150, %p151
      %p153 = scmp.ne.s32.totalorder %s139, %s140
      %p154 = scmp.eq.s32.totalorder %s24, 1
      %p155 = por %p153, %p154
      %p157 = scmp.ne.s32.totalorder %s140, %s156
      %p158 = scmp.eq.s32.totalorder %s24, 0
      %p159 = por %p157, %p158
      %p160 = scmp.le.s32.totalorder 1, %s18
      %p161 = scmp.lt.s32.totalorder %s18, 3
      %p162 = pnand %p160, %p161
      %p163 = pneg %p162
      // Predicated region
      $region9: #{tpu_custom_call.1} parent=5 // pred_check
        _
      $region10: #{tpu_custom_call.1} parent=5 // pred_check_branch
        %165 = sbr.rel (%p162) target = $region12
      $region11: #{tpu_custom_call.1} parent=5 // pred_region
        %s166 = ssub.s32 %s18, 1
      $region12: #{tpu_custom_call.1} parent=5 // pred_fallthru
        _
      %p167 = scmp.lt.s32.totalorder %s18, 2
      // Predicated region
      $region13: #{tpu_custom_call.1} parent=5 // pred_check
        %p168 = pneg %p167
      $region14: #{tpu_custom_call.1} parent=5 // pred_check_branch
        %170 = sbr.rel (%p168) target = $region16
      $region15: #{tpu_custom_call.1} parent=5 // pred_region
        // Predicated region
        $region17: #{tpu_custom_call.1} parent=15 // pred_check
          %p171 = pneg %p56
        $region18: #{tpu_custom_call.1} parent=15 // pred_check_branch
          %173 = sbr.rel (%p171) target = $region20
        $region19: #{tpu_custom_call.1} parent=15 // pred_region
          %s174 = sand.u32 %s46, 1
          %s175 = scalar_lea.sflag [#allocation3], %s174
          %s176 = sand.u32 %s46, 1
          %s177 = smul.addr %s176, 16
          %s178 = scalar_lea.vmem [#allocation2], %s177
          %s179 = sadd.s32 %s25, %s26
          %p180 = scmp.lt.s32.totalorder %s179, 0
          %s181 = scalar_select %p180, %s179, 0
          %s182 = smul.u32 2, %s181
          %184 = vsyncadd %s175, 0
          %s185 = smul.addr %s182, 8
          %s186 = scalar_lea.hbm %s0, %s185
          %s187 = sshll.u32 %s186, 4
          %s188 = int_to_ptr.hbm [resolvable:$true] %s187
          %s189 = sshll.u32 %s178, 4
          %s190 = int_to_ptr.vmem [resolvable:$true] %s189
          %195 = dma.hbm_to_vmem [thread:$0]  %s188, 256, %s190, %s175, 128, 128, 8
        $region20: #{tpu_custom_call.1} parent=15 // pred_fallthru
          _
        // Predicated region
        $region21: #{tpu_custom_call.1} parent=15 // pred_check
          %p196 = pneg %p88
        $region22: #{tpu_custom_call.1} parent=15 // pred_check_branch
          %198 = sbr.rel (%p196) target = $region24
        $region23: #{tpu_custom_call.1} parent=15 // pred_region
          %s199 = sand.u32 %s18, 1
          %s200 = scalar_lea.sflag [#allocation6], %s199
          %s201 = sand.u32 %s78, 1
          %s202 = smul.addr %s201, 16
          %s203 = scalar_lea.vmem [#allocation5], %s202
          %s204 = sadd.s32 %s25, %s26
          %p205 = scmp.lt.s32.totalorder %s204, 0
          %s206 = scalar_select %p205, %s204, 0
          %s207 = smul.u32 2, %s206
          %209 = vsyncadd %s200, 0
          %s210 = smul.addr %s207, 8
          %s211 = scalar_lea.hbm %s1, %s210
          %s212 = sshll.u32 %s211, 4
          %s213 = int_to_ptr.hbm [resolvable:$true] %s212
          %s214 = sshll.u32 %s203, 4
          %s215 = int_to_ptr.vmem [resolvable:$true] %s214
          %220 = dma.hbm_to_vmem [thread:$0]  %s213, 256, %s215, %s200, 128, 128, 8
        $region24: #{tpu_custom_call.1} parent=15 // pred_fallthru
          _
        // Predicated region
        $region25: #{tpu_custom_call.1} parent=15 // pred_check
          %p221 = pneg %p120
        $region26: #{tpu_custom_call.1} parent=15 // pred_check_branch
          %223 = sbr.rel (%p221) target = $region28
        $region27: #{tpu_custom_call.1} parent=15 // pred_region
          %s224 = sand.u32 %s18, 1
          %s225 = scalar_lea.sflag [#allocation6], %s224
          %s226 = sand.u32 %s110, 1
          %s227 = smul.addr %s226, 16
          %s228 = scalar_lea.vmem [#allocation7], %s227
          %s229 = sadd.s32 %s25, %s26
          %p230 = scmp.lt.s32.totalorder %s229, 0
          %s231 = scalar_select %p230, %s229, 0
          %s232 = smul.u32 2, %s231
          %234 = vsyncadd %s225, 0
          %s235 = smul.addr %s232, 8
          %s236 = scalar_lea.hbm %s2, %s235
          %s237 = sshll.u32 %s236, 4
          %s238 = int_to_ptr.hbm [resolvable:$true] %s237
          %s239 = sshll.u32 %s228, 4
          %s240 = int_to_ptr.vmem [resolvable:$true] %s239
          %245 = dma.hbm_to_vmem [thread:$0]  %s238, 256, %s240, %s225, 128, 128, 8
        $region28: #{tpu_custom_call.1} parent=15 // pred_fallthru
          _
      $region16: #{tpu_custom_call.1} parent=5 // pred_fallthru
        _
      %p246 = scmp.le.s32.totalorder 1, %s18
      %p247 = scmp.lt.s32.totalorder %s18, 3
      %p248 = pnand %p246, %p247
      %p249 = pneg %p248
      // Predicated region
      $region29: #{tpu_custom_call.1} parent=5 // pred_check
        _
      $region30: #{tpu_custom_call.1} parent=5 // pred_check_branch
        %251 = sbr.rel (%p248) target = $region32
      $region31: #{tpu_custom_call.1} parent=5 // pred_region
        %s252 = ssub.s32 %s18, 1
        %s253 = sand.u32 %s49, 1
        %s254 = scalar_lea.sflag [#allocation3], %s253
        %s255 = sand.u32 %s49, 1
        %s256 = smul.addr %s255, 16
        %s257 = scalar_lea.vmem [#allocation2], %s256
        // Predicated region
        $region33: #{tpu_custom_call.1} parent=31 // pred_check
          %p258 = pneg %p62
        $region34: #{tpu_custom_call.1} parent=31 // pred_check_branch
          %260 = sbr.rel (%p258) target = $region36
        $region35: #{tpu_custom_call.1} parent=31 // pred_region
          %262 = dma.done %s254, 256
        $region36: #{tpu_custom_call.1} parent=31 // pred_fallthru
          _
        %s263 = sand.u32 %s23, 1
        %s264 = scalar_lea.sflag [#allocation6], %s263
        %s265 = sand.u32 %s81, 1
        %s266 = smul.addr %s265, 16
        %s267 = scalar_lea.vmem [#allocation5], %s266
        // Predicated region
        $region37: #{tpu_custom_call.1} parent=31 // pred_check
          %p268 = pneg %p94
        $region38: #{tpu_custom_call.1} parent=31 // pred_check_branch
          %270 = sbr.rel (%p268) target = $region40
        $region39: #{tpu_custom_call.1} parent=31 // pred_region
          %272 = dma.done %s264, 256
        $region40: #{tpu_custom_call.1} parent=31 // pred_fallthru
          _
        %s273 = sand.u32 %s23, 1
        %s274 = scalar_lea.sflag [#allocation6], %s273
        %s275 = sand.u32 %s113, 1
        %s276 = smul.addr %s275, 16
        %s277 = scalar_lea.vmem [#allocation7], %s276
        // Predicated region
        $region41: #{tpu_custom_call.1} parent=31 // pred_check
          %p278 = pneg %p126
        $region42: #{tpu_custom_call.1} parent=31 // pred_check_branch
          %280 = sbr.rel (%p278) target = $region44
        $region43: #{tpu_custom_call.1} parent=31 // pred_region
          %282 = dma.done %s274, 256
        $region44: #{tpu_custom_call.1} parent=31 // pred_fallthru
          _
        %s283 = sand.u32 %s49, 1
        %s284 = scalar_lea.sflag [#allocation3], %s283
        %s285 = sand.u32 %s49, 1
        %s286 = smul.addr %s285, 16
        %s287 = scalar_lea.vmem [#allocation2], %s286
        %p288 = pneg %p62
        %p289 = pneg %p59
        %s290 = sand.u32 %s23, 1
        %s291 = scalar_lea.sflag [#allocation6], %s290
        %s292 = sand.u32 %s81, 1
        %s293 = smul.addr %s292, 16
        %s294 = scalar_lea.vmem [#allocation5], %s293
        %p295 = pneg %p94
        %p296 = pneg %p91
        %s297 = sand.u32 %s23, 1
        %s298 = scalar_lea.sflag [#allocation6], %s297
        %s299 = sand.u32 %s113, 1
        %s300 = smul.addr %s299, 16
        %s301 = scalar_lea.vmem [#allocation7], %s300
        %p302 = pneg %p126
        %p303 = pneg %p123
        %p304 = pneg %p152
        %p305 = pneg %p149
        %s306 = sand.u32 %s139, 1
        %s307 = scalar_lea.sflag [#allocation4], %s306
        %s308 = sand.u32 %s139, 1
        %s309 = smul.addr %s308, 8
        %s310 = scalar_lea.vmem [#allocation8], %s309
        %s311 = sadd.s32 %s27, %s28
        %p312 = scmp.lt.s32.totalorder %s311, 0
        %s313 = scalar_select %p312, %s311, 0
        %s314 = smul.u32 2, %s313
        %s315 = sadd.s32 %s27, %s28
        %p316 = scmp.lt.s32.totalorder %s315, 0
        %s317 = scalar_select %p316, %s315, 0
        %s318 = smul.u32 2, %s317
        %s319 = sadd.s32 %s27, %s28
        %p320 = scmp.lt.s32.totalorder %s319, 0
        %s321 = scalar_select %p320, %s319, 0
        %s322 = smul.u32 2, %s321
        %p323 = scmp.eq.s32.totalorder %s28, 0
        // Predicated region
        $region45: #{tpu_custom_call.1} parent=31 // pred_check
          %p324 = pneg %p323
        $region46: #{tpu_custom_call.1} parent=31 // pred_check_branch
          %326 = sbr.rel (%p324) target = $region48
        $region47: #{tpu_custom_call.1} parent=31 // pred_region
          %327 = vst [vmem:[%s310] sm:$0xff] 0.0
        $region48: #{tpu_custom_call.1} parent=31 // pred_fallthru
          _
        %v328 = vld [vmem:[%s257] sm:$0xff]
        %v329 = vld [vmem:[%s257 + $0x8] sm:$0xff]
        %v330 = vld [vmem:[%s267] sm:$0xff]
        %v331 = vld [vmem:[%s267 + $0x8] sm:$0xff]
        %v332 = vld [vmem:[%s277] sm:$0xff]
        %v333 = vld [vmem:[%s277 + $0x8] sm:$0xff]
        %v334 = vsub.f32 0.0, %v332
        %v335 = vsub.f32 0.0, %v333
        %v336 = vmul.f32 %v334, 1.442695
        %v337 = vpow.pop %v336
        %v338 = vmul.f32 %v335, 1.442695
        %v339 = vpow.pop %v338
        %v340 = vmul.f32 %v337, 1.4142
        %v341 = vmul.f32 %v339, 1.4142
        %v342 = vsub.f32 %v328, %v330
        %v343 = vsub.f32 %v329, %v331
        %v344 = vand.u32 2147483647, %v342
        %v345 = vand.u32 2147483647, %v343
        %v346 = vmul.f32 %v340, %v344
        %v347 = vmul.f32 %v341, %v345
        %v348 = vadd.f32 %v346, %v332
        %v349 = vadd.f32 %v347, %v333
        %v350 = vlaneseq
        %v351 = vshrl.u32 %v350, 7
        %v352 = vadd.s32 %v351, 8
        %s353 = sadd.s32 %s27, %s28
        %s354 = smul.u32 %s353, 16
        %v355 = vstv %s354
        %v356 = vadd.s32 %v355, %v351
        %v357 = vadd.s32 %v355, %v352
        %vm358 = vcmp.lt.s32.totalorder %v356, 16
        %vm359 = vcmp.lt.s32.totalorder %v357, 16
        %v360 = vsel %vm358, %v348, 0.0
        %v361 = vsel %vm359, %v349, 0.0
        %v362 = vadd.f32 %v360, %v361
        %v363 = vld [vmem:[%s310] sm:$0xff]
        %v364 = vadd.f32 %v363, %v362
        %365 = vst [vmem:[%s310] sm:$0xff] %v364
        %s366 = sand.u32 %s139, 1
        %s367 = scalar_lea.sflag [#allocation4], %s366
        %s368 = sand.u32 %s139, 1
        %s369 = smul.addr %s368, 8
        %s370 = scalar_lea.vmem [#allocation8], %s369
        // Predicated region
        $region49: #{tpu_custom_call.1} parent=31 // pred_check
          %p371 = pneg %p149
        $region50: #{tpu_custom_call.1} parent=31 // pred_check_branch
          %373 = sbr.rel (%p371) target = $region52
        $region51: #{tpu_custom_call.1} parent=31 // pred_region
          %375 = vsyncadd %s367, 0
          %s376 = smul.addr %s27, 8
          %s377 = scalar_lea.hbm %s3, %s376
          %s379 = sshll.u32 %s370, 4
          %s380 = int_to_ptr.vmem [resolvable:$true] %s379
          %s381 = sshll.u32 %s377, 4
          %s382 = int_to_ptr.hbm [resolvable:$true] %s381
          %384 = dma.vmem_to_hbm [thread:$0]  %s380, 128, %s382, %s367
        $region52: #{tpu_custom_call.1} parent=31 // pred_fallthru
          _
      $region32: #{tpu_custom_call.1} parent=5 // pred_fallthru
        _
      %p385 = scmp.le.s32.totalorder 2, %s18
      // Predicated region
      $region53: #{tpu_custom_call.1} parent=5 // pred_check
        %p386 = pneg %p385
      $region54: #{tpu_custom_call.1} parent=5 // pred_check_branch
        %388 = sbr.rel (%p386) target = $region56
      $region55: #{tpu_custom_call.1} parent=5 // pred_region
        %s389 = ssub.s32 %s18, 2
        // Predicated region
        $region57: #{tpu_custom_call.1} parent=55 // pred_check
          %p390 = pneg %p155
        $region58: #{tpu_custom_call.1} parent=55 // pred_check_branch
          %392 = sbr.rel (%p390) target = $region60
        $region59: #{tpu_custom_call.1} parent=55 // pred_region
          %s393 = sand.u32 %s140, 1
          %s394 = scalar_lea.sflag [#allocation4], %s393
          %s395 = sand.u32 %s140, 1
          %s396 = smul.addr %s395, 8
          %s397 = scalar_lea.vmem [#allocation8], %s396
          %399 = dma.done %s394, 128
        $region60: #{tpu_custom_call.1} parent=55 // pred_fallthru
          _
      $region56: #{tpu_custom_call.1} parent=5 // pred_fallthru
        _
    $region6: #{tpu_custom_call.1} parent=1 // loop_footer
      %s22 = sadd.s32 1, %s18
    $region7: #{tpu_custom_call.1} parent=1 // loop_footer_branch
      %17 = sbr.rel target = $region3
    $region8: #{tpu_custom_call.1} parent=1 // loop_exit
      _
    %400 = vsyncpa [#allocation3], 1
    %s401 = scalar_lea.sflag [#allocation3], 1
    %402 = vsyncpa %s401, 1
    %403 = vsyncpa [#allocation6], 1
    %s404 = scalar_lea.sflag [#allocation6], 1
    %405 = vsyncpa %s404, 1
    %406 = vsyncpa [#allocation4], 1
    %s407 = scalar_lea.sflag [#allocation4], 1
    %408 = vsyncpa %s407, 1

</llo_original>
